<compile_context>
chip_gen: v6e
topology: v6e:2x2x1
jax: 0.10.0
libtpu: 0.0.40
codegen_flags: <defaults>
</compile_context>

<pallas_src>
import functools

import jax
import jax.numpy as jnp
from jax import lax
from jax.experimental import pallas as pl
from jax.experimental.pallas import tpu as pltpu

_LN_EPS = 1e-6


def _mlp_kernel(x_ref, a_ref, w0_ref, b0_ref, w1_ref, b1_ref, o_ref):
    # x_ref: (tile_p, pack*D) lane-dense tile; each row holds `pack`
    # independent feature vectors of width D, concatenated.
    x = x_ref[...].astype(jnp.float32)

    # Pre-LayerNorm. `a_ref` is block_diag(ones(D,D)/D x pack): a matmul with
    # it computes the per-chunk mean and broadcasts it back across the chunk,
    # keeping the reduction on the MXU and all data at full lane width.
    mu = jnp.dot(x, a_ref[...], preferred_element_type=jnp.float32)
    xc = x - mu
    var = jnp.dot(xc * xc, a_ref[...], preferred_element_type=jnp.float32)
    xn = xc * lax.rsqrt(var + _LN_EPS)
    # gamma/beta are already folded into W0/b0 by the wrapper.

    # dense_mlp_0: Linear(D->H) + ReLU  (block-diagonal packed weights).
    h = jnp.dot(xn, w0_ref[...], preferred_element_type=jnp.float32) + b0_ref[...]
    h = jnp.maximum(h, 0.0)

    # dense_mlp_1: Linear(H->O), no output activation.
    y = jnp.dot(h, w1_ref[...], preferred_element_type=jnp.float32) + b1_ref[...]

    # Residual uses the ORIGINAL (pre-layernorm) inputs, as in the PyTorch code.
    o_ref[...] = (y + x).astype(o_ref.dtype)


def _round_up(x, m):
    return ((x + m - 1) // m) * m


@functools.partial(jax.jit, static_argnames=("tm",))
def mlp_forward(x, gamma, beta, w0, b0, w1, b1, *, tm=1024):
    """Fused SAVi MLP forward. x: (N, D) -> (N, O)."""
    N, D = x.shape
    H = w0.shape[1]
    O = w1.shape[1]

    # ---- Fold LayerNorm affine into the first linear layer. ----
    g = gamma.reshape(D).astype(jnp.float32)
    be = beta.reshape(1, D).astype(jnp.float32)
    w0 = w0.astype(jnp.float32)
    b0 = b0.reshape(1, H).astype(jnp.float32)
    w1 = w1.astype(jnp.float32)
    b1 = b1.reshape(1, O).astype(jnp.float32)
    w0f = w0 * g[:, None]          # diag(gamma) @ W0
    b0f = be @ w0 + b0             # beta @ W0 + b0

    # ---- Lane-dense packing factor. ----
    # View (N, D) as (N/pack, pack*D) so the last dim fills all 128 lanes.
    # Requires D == O so residual/output pack identically.
    if D == O and D < 128 and 128 % D == 0:
        pack = 128 // D
    else:
        pack = 1

    # ---- Row tile (in original-row units): multiple of 8*pack, clamped so
    # tiny inputs are not padded up to the full default tile. ----
    align = 8 * pack
    tile = min(int(tm), _round_up(N, align))
    tile = max(align, _round_up(tile, align))
    n_pad = _round_up(N, tile)
    if n_pad != N:
        x = jnp.pad(x, ((0, n_pad - N), (0, 0)))  # zero rows: LN-safe (var=0 -> xn=0)

    x_packed = x.reshape(n_pad // pack, pack * D)
    tile_p = tile // pack

    # ---- Packed (block-diagonal) constants, built once per call. ----
    eye_p = jnp.eye(pack, dtype=jnp.float32)
    a_mat = jnp.kron(eye_p, jnp.full((D, D), 1.0 / D, jnp.float32))  # (pack*D, pack*D)
    w0p = jnp.kron(eye_p, w0f)                                       # (pack*D, pack*H)
    b0p = jnp.tile(b0f, (1, pack))                                   # (1, pack*H)
    w1p = jnp.kron(eye_p, w1)                                        # (pack*H, pack*O)
    b1p = jnp.tile(b1, (1, pack))                                    # (1, pack*O)

    grid = (n_pad // tile,)

    cost = pl.CostEstimate(
        flops=2 * n_pad * (D * H + H * O),
        transcendentals=n_pad,  # one rsqrt per row
        bytes_accessed=n_pad * (D + O) * x.dtype.itemsize
        + 4 * (D * H + H + H * O + O),
    )

    out_packed = pl.pallas_call(
        _mlp_kernel,
        out_shape=jax.ShapeDtypeStruct((n_pad // pack, pack * O), x.dtype),
        grid_spec=pltpu.PrefetchScalarGridSpec(
            num_scalar_prefetch=0,
            grid=grid,
            in_specs=[
                pl.BlockSpec((tile_p, pack * D), lambda i: (i, 0)),        # x rows (lane-dense)
                pl.BlockSpec((pack * D, pack * D), lambda i: (0, 0)),      # LN averaging matrix
                pl.BlockSpec((pack * D, pack * H), lambda i: (0, 0)),      # W0 (gamma folded, packed)
                pl.BlockSpec((1, pack * H), lambda i: (0, 0)),             # b0 (beta folded, packed)
                pl.BlockSpec((pack * H, pack * O), lambda i: (0, 0)),      # W1 (packed)
                pl.BlockSpec((1, pack * O), lambda i: (0, 0)),             # b1 (packed)
            ],
            out_specs=pl.BlockSpec((tile_p, pack * O), lambda i: (i, 0)),
        ),
        compiler_params=pltpu.CompilerParams(
            dimension_semantics=("parallel",),
        ),
        cost_estimate=cost,
    )(x_packed, a_mat, w0p, b0p, w1p, b1p)

    out = out_packed.reshape(n_pad, O)
    return out[:N]


def _uniform_linear_init(key, fan_in, shape):
    # PyTorch nn.Linear default init: U(-1/sqrt(fan_in), 1/sqrt(fan_in)).
    bound = 1.0 / jnp.sqrt(jnp.float32(fan_in))
    return jax.random.uniform(key, shape, jnp.float32, -bound, bound)


def reference_mlp(x, gamma, beta, w0, b0, w1, b1):
    mu = jnp.mean(x, axis=-1, keepdims=True)
    var = jnp.mean((x - mu) ** 2, axis=-1, keepdims=True)
    xn = (x - mu) / jnp.sqrt(var + _LN_EPS)
    xn = xn * gamma.reshape(1, -1) + beta.reshape(1, -1)
    h = jnp.maximum(xn @ w0 + b0.reshape(1, -1), 0.0)
    y = h @ w1 + b1.reshape(1, -1)
    return y + x


if __name__ == "__main__":
    input_size, hidden_size, output_size = 32, 64, 32  # residual needs in == out

    key = jax.random.PRNGKey(0)
    kx, kg, kb, kw0, kb0, kw1, kb1 = jax.random.split(key, 7)

    # LayerNorm params (non-trivial, to exercise the gamma/beta fold).
    gamma = 1.0 + 0.1 * jax.random.normal(kg, (input_size,), jnp.float32)
    beta = 0.1 * jax.random.normal(kb, (input_size,), jnp.float32)

    # Linear params, deterministic PyTorch-style uniform init.
    w0 = _uniform_linear_init(kw0, input_size, (input_size, hidden_size))
    b0 = _uniform_linear_init(kb0, input_size, (hidden_size,))
    w1 = _uniform_linear_init(kw1, hidden_size, (hidden_size, output_size))
    b1 = _uniform_linear_init(kb1, hidden_size, (output_size,))

    # (batch, seq): small module-consistent shape, a non-aligned row count
    # (exercises padding), and a larger one (exercises a multi-step grid).
    for batch, seq in [(2, 8), (4, 25), (8, 256)]:
        # PyTorch input would be [batch, seq, input_size]; flatten leading dims.
        x = jax.random.normal(kx, (batch * seq, input_size), jnp.float32)

        out = mlp_forward(x, gamma, beta, w0, b0, w1, b1, tm=1024)
        out = jax.block_until_ready(out)

        ref = reference_mlp(x, gamma, beta, w0, b0, w1, b1)
        assert out.shape == (batch * seq, output_size)
        assert jnp.allclose(out, ref, atol=1e-4, rtol=1e-4), (
            f"mismatch vs JAX reference at N={batch * seq}"
        )

    print("KERNEL_OK")
</pallas_src>

<mosaic_0001>
module attributes {stable_mosaic.version = 11 : i64} {
  func.func @_mlp_kernel(%arg0: i32, %arg1: memref<8x128xf32, #tpu.memory_space<vmem>>, %arg2: memref<128x128xf32, #tpu.memory_space<vmem>>, %arg3: memref<128x256xf32, #tpu.memory_space<vmem>>, %arg4: memref<1x256xf32, #tpu.memory_space<vmem>>, %arg5: memref<256x128xf32, #tpu.memory_space<vmem>>, %arg6: memref<1x128xf32, #tpu.memory_space<vmem>>, %arg7: memref<8x128xf32, #tpu.memory_space<vmem>>) attributes {dimension_semantics = [#tpu.dimension_semantics<parallel>], iteration_bounds = array<i64: 1>, scalar_prefetch = 0 : i64, scratch_operands = 0 : i64, tpu.core_type = #tpu.core_type<tc>, window_params = [{transform_indices = @transform_0, window_bounds = array<i64: 8, 128>}, {pipeline_mode = #tpu.pipeline_mode<synchronous>, transform_indices = @transform_1, window_bounds = array<i64: 128, 128>}, {pipeline_mode = #tpu.pipeline_mode<synchronous>, transform_indices = @transform_2, window_bounds = array<i64: 128, 256>}, {pipeline_mode = #tpu.pipeline_mode<synchronous>, transform_indices = @transform_3, window_bounds = array<i64: 1, 256>}, {pipeline_mode = #tpu.pipeline_mode<synchronous>, transform_indices = @transform_4, window_bounds = array<i64: 256, 128>}, {pipeline_mode = #tpu.pipeline_mode<synchronous>, transform_indices = @transform_5, window_bounds = array<i64: 1, 128>}, {transform_indices = @transform_6, window_bounds = array<i64: 8, 128>}]} {
    %c0 = arith.constant 0 : index
    %c0_0 = arith.constant 0 : index
    %0 = vector.load %arg1[%c0, %c0_0] : memref<8x128xf32, #tpu.memory_space<vmem>>, vector<8x128xf32>
    %c0_1 = arith.constant 0 : index
    %c0_2 = arith.constant 0 : index
    %1 = vector.load %arg2[%c0_1, %c0_2] : memref<128x128xf32, #tpu.memory_space<vmem>>, vector<128x128xf32>
    %cst = arith.constant dense<0.000000e+00> : vector<8x128xf32>
    %2 = tpu.matmul %0, %1, %cst {dimension_numbers = #tpu.dot_dimension_numbers<[1], [0], [0], [1], [0, 0, 1, 1], [], []>} : vector<8x128xf32>, vector<128x128xf32>, vector<8x128xf32> -> vector<8x128xf32>
    %3 = arith.subf %0, %2 : vector<8x128xf32>
    %4 = arith.mulf %3, %3 : vector<8x128xf32>
    %c0_3 = arith.constant 0 : index
    %c0_4 = arith.constant 0 : index
    %5 = vector.load %arg2[%c0_3, %c0_4] : memref<128x128xf32, #tpu.memory_space<vmem>>, vector<128x128xf32>
    %cst_5 = arith.constant dense<0.000000e+00> : vector<8x128xf32>
    %6 = tpu.matmul %4, %5, %cst_5 {dimension_numbers = #tpu.dot_dimension_numbers<[1], [0], [0], [1], [0, 0, 1, 1], [], []>} : vector<8x128xf32>, vector<128x128xf32>, vector<8x128xf32> -> vector<8x128xf32>
    %cst_6 = arith.constant 9.99999997E-7 : f32
    %7 = vector.broadcast %cst_6 : f32 to vector<8x128xf32>
    %8 = arith.addf %6, %7 : vector<8x128xf32>
    %9 = math.rsqrt %8 : vector<8x128xf32>
    %10 = arith.mulf %3, %9 : vector<8x128xf32>
    %c0_7 = arith.constant 0 : index
    %c0_8 = arith.constant 0 : index
    %11 = vector.load %arg3[%c0_7, %c0_8] : memref<128x256xf32, #tpu.memory_space<vmem>>, vector<128x256xf32>
    %cst_9 = arith.constant dense<0.000000e+00> : vector<8x256xf32>
    %12 = tpu.matmul %10, %11, %cst_9 {dimension_numbers = #tpu.dot_dimension_numbers<[1], [0], [0], [1], [0, 0, 1, 1], [], []>} : vector<8x128xf32>, vector<128x256xf32>, vector<8x256xf32> -> vector<8x256xf32>
    %c0_10 = arith.constant 0 : index
    %c0_11 = arith.constant 0 : index
    %13 = vector.load %arg4[%c0_10, %c0_11] : memref<1x256xf32, #tpu.memory_space<vmem>>, vector<1x256xf32>
    %14 = vector.broadcast %13 : vector<1x256xf32> to vector<8x256xf32>
    %15 = arith.addf %12, %14 : vector<8x256xf32>
    %cst_12 = arith.constant 0.000000e+00 : f32
    %16 = vector.broadcast %cst_12 : f32 to vector<8x256xf32>
    %17 = arith.maximumf %15, %16 : vector<8x256xf32>
    %c0_13 = arith.constant 0 : index
    %c0_14 = arith.constant 0 : index
    %18 = vector.load %arg5[%c0_13, %c0_14] : memref<256x128xf32, #tpu.memory_space<vmem>>, vector<256x128xf32>
    %cst_15 = arith.constant dense<0.000000e+00> : vector<8x128xf32>
    %19 = tpu.matmul %17, %18, %cst_15 {dimension_numbers = #tpu.dot_dimension_numbers<[1], [0], [0], [1], [0, 0, 1, 1], [], []>} : vector<8x256xf32>, vector<256x128xf32>, vector<8x128xf32> -> vector<8x128xf32>
    %c0_16 = arith.constant 0 : index
    %c0_17 = arith.constant 0 : index
    %20 = vector.load %arg6[%c0_16, %c0_17] : memref<1x128xf32, #tpu.memory_space<vmem>>, vector<1x128xf32>
    %21 = vector.broadcast %20 : vector<1x128xf32> to vector<8x128xf32>
    %22 = arith.addf %19, %21 : vector<8x128xf32>
    %23 = arith.addf %22, %0 : vector<8x128xf32>
    %c0_18 = arith.constant 0 : index
    %c0_19 = arith.constant 0 : index
    %24 = vector.load %arg7[%c0_18, %c0_19] : memref<8x128xf32, #tpu.memory_space<vmem>>, vector<8x128xf32>
    tpu.vector_store %arg7[%c0_18, %c0_19], %23 {strides = array<i32>} : memref<8x128xf32, #tpu.memory_space<vmem>>, vector<8x128xf32>,
    return
  }
  func.func @transform_0(%arg0: i32) -> (i32, i32) {
    %c0_i32 = arith.constant 0 : i32
    %c0_i32_0 = arith.constant 0 : i32
    return %arg0, %c0_i32 : i32, i32
  }
  func.func @transform_1(%arg0: i32) -> (i32, i32) {
    %c0_i32 = arith.constant 0 : i32
    %c0_i32_0 = arith.constant 0 : i32
    %c0_i32_1 = arith.constant 0 : i32
    return %c0_i32, %c0_i32_0 : i32, i32
  }
  func.func @transform_2(%arg0: i32) -> (i32, i32) {
    %c0_i32 = arith.constant 0 : i32
    %c0_i32_0 = arith.constant 0 : i32
    %c0_i32_1 = arith.constant 0 : i32
    return %c0_i32, %c0_i32_0 : i32, i32
  }
  func.func @transform_3(%arg0: i32) -> (i32, i32) {
    %c0_i32 = arith.constant 0 : i32
    %c0_i32_0 = arith.constant 0 : i32
    %c0_i32_1 = arith.constant 0 : i32
    return %c0_i32, %c0_i32_0 : i32, i32
  }
  func.func @transform_4(%arg0: i32) -> (i32, i32) {
    %c0_i32 = arith.constant 0 : i32
    %c0_i32_0 = arith.constant 0 : i32
    %c0_i32_1 = arith.constant 0 : i32
    return %c0_i32, %c0_i32_0 : i32, i32
  }
  func.func @transform_5(%arg0: i32) -> (i32, i32) {
    %c0_i32 = arith.constant 0 : i32
    %c0_i32_0 = arith.constant 0 : i32
    %c0_i32_1 = arith.constant 0 : i32
    return %c0_i32, %c0_i32_0 : i32, i32
  }
  func.func @transform_6(%arg0: i32) -> (i32, i32) {
    %c0_i32 = arith.constant 0 : i32
    %c0_i32_0 = arith.constant 0 : i32
    return %arg0, %c0_i32 : i32, i32
  }
}

</mosaic_0001>

<llo_original>
// kernel: mlp_forward.1
$region0: #{mlp_forward.1}
  #allocation0 [shape = 'u32[]', space=smem, size = 0x4, offset = 0x4, fixed_abs, tag = 'smem constant byte address 0x4 - core index']
  #allocation1 [shape = 'u32[144,128]{1,0:T(1,128)}', space=vmem, size = 0x12000, scoped, tag = 'internal scratch']
  %s0 = inlined_call_operand.vmem [shape: f32[8,128], index: 0, kind: input, shape index: {}]
  %s1 = inlined_call_operand.vmem [shape: f32[128,128], index: 1, kind: input, shape index: {}]
  %s2 = inlined_call_operand.vmem [shape: f32[128,256], index: 2, kind: input, shape index: {}]
  %s3 = inlined_call_operand.vmem [shape: f32[1,256], index: 3, kind: input, shape index: {}]
  %s4 = inlined_call_operand.vmem [shape: f32[256,128], index: 4, kind: input, shape index: {}]
  %s5 = inlined_call_operand.vmem [shape: f32[1,128], index: 5, kind: input, shape index: {}]
  %s6 = inlined_call_operand.vmem [shape: f32[8,128], index: 6, kind: output, shape index: {}]
  %s7 = sld [smem:[#allocation0]]
  $region34: #{mlp_forward.1} parent=0
    _
  %s9 = ssub.s32 1, %s7
  %s10 = scalar_select 0, %s9, %s7
  // Predicated region
  $region2: #{mlp_forward.1} parent=0 // pred_check
    _
  $region3: #{mlp_forward.1} parent=0 // pred_check_branch
    %12 = sbr.rel (0) target = $region5
  $region4: #{mlp_forward.1} parent=0 // pred_region
    _
  $region5: #{mlp_forward.1} parent=0 // pred_fallthru
    _
  // Predicated region
  $region6: #{mlp_forward.1} parent=0 // pred_check
    _
  $region7: #{mlp_forward.1} parent=0 // pred_check_branch
    %14 = sbr.rel (0) target = $region9
  $region8: #{mlp_forward.1} parent=0 // pred_region
    _
  $region9: #{mlp_forward.1} parent=0 // pred_fallthru
    _
  // Predicated region
  $region10: #{mlp_forward.1} parent=0 // pred_check
    _
  $region11: #{mlp_forward.1} parent=0 // pred_check_branch
    %16 = sbr.rel (0) target = $region13
  $region12: #{mlp_forward.1} parent=0 // pred_region
    _
  $region13: #{mlp_forward.1} parent=0 // pred_fallthru
    _
  // Predicated region
  $region14: #{mlp_forward.1} parent=0 // pred_check
    _
  $region15: #{mlp_forward.1} parent=0 // pred_check_branch
    %18 = sbr.rel (0) target = $region17
  $region16: #{mlp_forward.1} parent=0 // pred_region
    _
  $region17: #{mlp_forward.1} parent=0 // pred_fallthru
    _
  // Predicated region
  $region18: #{mlp_forward.1} parent=0 // pred_check
    _
  $region19: #{mlp_forward.1} parent=0 // pred_check_branch
    %20 = sbr.rel (0) target = $region21
  $region20: #{mlp_forward.1} parent=0 // pred_region
    _
  $region21: #{mlp_forward.1} parent=0 // pred_fallthru
    _
  // Predicated region
  $region22: #{mlp_forward.1} parent=0 // pred_check
    _
  $region23: #{mlp_forward.1} parent=0 // pred_check_branch
    %22 = sbr.rel (0) target = $region25
  $region24: #{mlp_forward.1} parent=0 // pred_region
    _
  $region25: #{mlp_forward.1} parent=0 // pred_fallthru
    _
  %v23 = vld [vmem:[%s0] sm:$0xff]
  %v24 = vld [vmem:[%s1] sm:$0xff]
  %v25 = vld [vmem:[%s1 + $0x8] sm:$0xff]
  %v26 = vld [vmem:[%s1 + $0x10] sm:$0xff]
  %v27 = vld [vmem:[%s1 + $0x18] sm:$0xff]
  %v28 = vld [vmem:[%s1 + $0x20] sm:$0xff]
  %v29 = vld [vmem:[%s1 + $0x28] sm:$0xff]
  %v30 = vld [vmem:[%s1 + $0x30] sm:$0xff]
  %v31 = vld [vmem:[%s1 + $0x38] sm:$0xff]
  %v32 = vld [vmem:[%s1 + $0x40] sm:$0xff]
  %v33 = vld [vmem:[%s1 + $0x48] sm:$0xff]
  %v34 = vld [vmem:[%s1 + $0x50] sm:$0xff]
  %v35 = vld [vmem:[%s1 + $0x58] sm:$0xff]
  %v36 = vld [vmem:[%s1 + $0x60] sm:$0xff]
  %v37 = vld [vmem:[%s1 + $0x68] sm:$0xff]
  %v38 = vld [vmem:[%s1 + $0x70] sm:$0xff]
  %v39 = vld [vmem:[%s1 + $0x78] sm:$0xff]
  %40 = vmatprep.subr.mxu0 0.0
  %41 = vmatpush1.msra.mxu0 %v39
  %42 = vmatprep.subr.mxu0 0.0
  %43 = vmatpush1.msra.mxu0 %v38
  %44 = vmatprep.subr.mxu0 0.0
  %45 = vmatpush1.msra.mxu0 %v37
  %46 = vmatprep.subr.mxu0 0.0
  %47 = vmatpush1.msra.mxu0 %v36
  %48 = vmatprep.subr.mxu0 0.0
  %49 = vmatpush1.msra.mxu0 %v35
  %50 = vmatprep.subr.mxu0 0.0
  %51 = vmatpush1.msra.mxu0 %v34
  %52 = vmatprep.subr.mxu0 0.0
  %53 = vmatpush1.msra.mxu0 %v33
  %54 = vmatprep.subr.mxu0 0.0
  %55 = vmatpush1.msra.mxu0 %v32
  %56 = vmatprep.subr.mxu0 0.0
  %57 = vmatpush1.msra.mxu0 %v31
  %58 = vmatprep.subr.mxu0 0.0
  %59 = vmatpush1.msra.mxu0 %v30
  %60 = vmatprep.subr.mxu0 0.0
  %61 = vmatpush1.msra.mxu0 %v29
  %62 = vmatprep.subr.mxu0 0.0
  %63 = vmatpush1.msra.mxu0 %v28
  %64 = vmatprep.subr.mxu0 0.0
  %65 = vmatpush1.msra.mxu0 %v27
  %66 = vmatprep.subr.mxu0 0.0
  %67 = vmatpush1.msra.mxu0 %v26
  %68 = vmatprep.subr.mxu0 0.0
  %69 = vmatpush1.msra.mxu0 %v25
  %70 = vmatprep.subr.mxu0 0.0
  %71 = vmatpush1.msra.mxu0 %v24
  %72 = vmatprep.subr.mxu0 0.0
  %73 = vmatpush2.msra.mxu0 0.0
  %74 = vmatprep.subr.mxu0 0.0
  %75 = vmatpush2.msra.mxu0 0.0
  %76 = vmatprep.subr.mxu0 0.0
  %77 = vmatpush2.msra.mxu0 0.0
  %78 = vmatprep.subr.mxu0 0.0
  %79 = vmatpush2.msra.mxu0 0.0
  %80 = vmatprep.subr.mxu0 0.0
  %81 = vmatpush2.msra.mxu0 0.0
  %82 = vmatprep.subr.mxu0 0.0
  %83 = vmatpush2.msra.mxu0 0.0
  %84 = vmatprep.subr.mxu0 0.0
  %85 = vmatpush2.msra.mxu0 0.0
  %86 = vmatprep.subr.mxu0 0.0
  %87 = vmatpush2.msra.mxu0 0.0
  %88 = vmatprep.subr.mxu0 0.0
  %89 = vmatpush2.msra.mxu0 0.0
  %90 = vmatprep.subr.mxu0 0.0
  %91 = vmatpush2.msra.mxu0 0.0
  %92 = vmatprep.subr.mxu0 0.0
  %93 = vmatpush2.msra.mxu0 0.0
  %94 = vmatprep.subr.mxu0 0.0
  %95 = vmatpush2.msra.mxu0 0.0
  %96 = vmatprep.subr.mxu0 0.0
  %97 = vmatpush2.msra.mxu0 0.0
  %98 = vmatprep.subr.mxu0 0.0
  %99 = vmatpush2.msra.mxu0 0.0
  %100 = vmatprep.subr.mxu0 0.0
  %101 = vmatpush2.msra.mxu0 0.0
  %102 = vmatprep.subr.mxu0 0.0
  %103 = vmatpush2.msra.mxu0 0.0
  %104 = vmatprep.mubr.f32.mxu0 0.0
  %105 = vmatmul.mubr.f32.gmra.mxu0 %v23
  %v106 = vpop.f32.mrf.mxu0
  %v107 = vadd.f32 0.0, %v106
  %v108 = vpop.f32.mrf.mxu0
  %109 = vdwg.mxu0
  %v110 = vsub.f32 %v23, %v107
  %v111 = vmul.f32 %v110, %v110
  %112 = vmatprep.subr.mxu0 0.0
  %113 = vmatpush1.msra.mxu0 %v39
  %114 = vmatprep.subr.mxu0 0.0
  %115 = vmatpush1.msra.mxu0 %v38
  %116 = vmatprep.subr.mxu0 0.0
  %117 = vmatpush1.msra.mxu0 %v37
  %118 = vmatprep.subr.mxu0 0.0
  %119 = vmatpush1.msra.mxu0 %v36
  %120 = vmatprep.subr.mxu0 0.0
  %121 = vmatpush1.msra.mxu0 %v35
  %122 = vmatprep.subr.mxu0 0.0
  %123 = vmatpush1.msra.mxu0 %v34
  %124 = vmatprep.subr.mxu0 0.0
  %125 = vmatpush1.msra.mxu0 %v33
  %126 = vmatprep.subr.mxu0 0.0
  %127 = vmatpush1.msra.mxu0 %v32
  %128 = vmatprep.subr.mxu0 0.0
  %129 = vmatpush1.msra.mxu0 %v31
  %130 = vmatprep.subr.mxu0 0.0
  %131 = vmatpush1.msra.mxu0 %v30
  %132 = vmatprep.subr.mxu0 0.0
  %133 = vmatpush1.msra.mxu0 %v29
  %134 = vmatprep.subr.mxu0 0.0
  %135 = vmatpush1.msra.mxu0 %v28
  %136 = vmatprep.subr.mxu0 0.0
  %137 = vmatpush1.msra.mxu0 %v27
  %138 = vmatprep.subr.mxu0 0.0
  %139 = vmatpush1.msra.mxu0 %v26
  %140 = vmatprep.subr.mxu0 0.0
  %141 = vmatpush1.msra.mxu0 %v25
  %142 = vmatprep.subr.mxu0 0.0
  %143 = vmatpush1.msra.mxu0 %v24
  %144 = vmatprep.subr.mxu0 0.0
  %145 = vmatpush2.msra.mxu0 0.0
  %146 = vmatprep.subr.mxu0 0.0
  %147 = vmatpush2.msra.mxu0 0.0
  %148 = vmatprep.subr.mxu0 0.0
  %149 = vmatpush2.msra.mxu0 0.0
  %150 = vmatprep.subr.mxu0 0.0
  %151 = vmatpush2.msra.mxu0 0.0
  %152 = vmatprep.subr.mxu0 0.0
  %153 = vmatpush2.msra.mxu0 0.0
  %154 = vmatprep.subr.mxu0 0.0
  %155 = vmatpush2.msra.mxu0 0.0
  %156 = vmatprep.subr.mxu0 0.0
  %157 = vmatpush2.msra.mxu0 0.0
  %158 = vmatprep.subr.mxu0 0.0
  %159 = vmatpush2.msra.mxu0 0.0
  %160 = vmatprep.subr.mxu0 0.0
  %161 = vmatpush2.msra.mxu0 0.0
  %162 = vmatprep.subr.mxu0 0.0
  %163 = vmatpush2.msra.mxu0 0.0
  %164 = vmatprep.subr.mxu0 0.0
  %165 = vmatpush2.msra.mxu0 0.0
  %166 = vmatprep.subr.mxu0 0.0
  %167 = vmatpush2.msra.mxu0 0.0
  %168 = vmatprep.subr.mxu0 0.0
  %169 = vmatpush2.msra.mxu0 0.0
  %170 = vmatprep.subr.mxu0 0.0
  %171 = vmatpush2.msra.mxu0 0.0
  %172 = vmatprep.subr.mxu0 0.0
  %173 = vmatpush2.msra.mxu0 0.0
  %174 = vmatprep.subr.mxu0 0.0
  %175 = vmatpush2.msra.mxu0 0.0
  %176 = vmatprep.mubr.f32.mxu0 0.0
  %177 = vmatmul.mubr.f32.gmra.mxu0 %v111
  %v178 = vpop.f32.mrf.mxu0
  %v179 = vadd.f32 1e-06, %v178
  %v180 = vpop.f32.mrf.mxu0
  %181 = vdwg.mxu0
  %v182 = vrsqrt.pop %v179
  %v183 = vmul.f32 %v110, %v182
  %v184 = vld [vmem:[%s2] sm:$0xff]
  %v185 = vld [vmem:[%s2 + $0x8] sm:$0xff]
  %v186 = vld [vmem:[%s2 + $0x10] sm:$0xff]
  %v187 = vld [vmem:[%s2 + $0x18] sm:$0xff]
  %v188 = vld [vmem:[%s2 + $0x20] sm:$0xff]
  %v189 = vld [vmem:[%s2 + $0x28] sm:$0xff]
  %v190 = vld [vmem:[%s2 + $0x30] sm:$0xff]
  %v191 = vld [vmem:[%s2 + $0x38] sm:$0xff]
  %v192 = vld [vmem:[%s2 + $0x40] sm:$0xff]
  %v193 = vld [vmem:[%s2 + $0x48] sm:$0xff]
  %v194 = vld [vmem:[%s2 + $0x50] sm:$0xff]
  %v195 = vld [vmem:[%s2 + $0x58] sm:$0xff]
  %v196 = vld [vmem:[%s2 + $0x60] sm:$0xff]
  %v197 = vld [vmem:[%s2 + $0x68] sm:$0xff]
  %v198 = vld [vmem:[%s2 + $0x70] sm:$0xff]
  %v199 = vld [vmem:[%s2 + $0x78] sm:$0xff]
  %v200 = vld [vmem:[%s2 + $0x80] sm:$0xff]
  %v201 = vld [vmem:[%s2 + $0x88] sm:$0xff]
  %v202 = vld [vmem:[%s2 + $0x90] sm:$0xff]
  %v203 = vld [vmem:[%s2 + $0x98] sm:$0xff]
  %v204 = vld [vmem:[%s2 + $0xa0] sm:$0xff]
  %v205 = vld [vmem:[%s2 + $0xa8] sm:$0xff]
  %v206 = vld [vmem:[%s2 + $0xb0] sm:$0xff]
  %v207 = vld [vmem:[%s2 + $0xb8] sm:$0xff]
  %v208 = vld [vmem:[%s2 + $0xc0] sm:$0xff]
  %v209 = vld [vmem:[%s2 + $0xc8] sm:$0xff]
  %v210 = vld [vmem:[%s2 + $0xd0] sm:$0xff]
  %v211 = vld [vmem:[%s2 + $0xd8] sm:$0xff]
  %v212 = vld [vmem:[%s2 + $0xe0] sm:$0xff]
  %v213 = vld [vmem:[%s2 + $0xe8] sm:$0xff]
  %v214 = vld [vmem:[%s2 + $0xf0] sm:$0xff]
  %v215 = vld [vmem:[%s2 + $0xf8] sm:$0xff]
  %v216 = vld [vmem:[%s3] sm:$0x3]
  %v218 = vlaneseq
  %v219 = vshrl.u32 %v218, 7
  %v220 = vsub.s32 0, %v219
  %v221 = vrot.slane %v216, %v220
  %v222 = vlaneseq
  %v223 = vshrl.u32 %v222, 7
  %v224 = vsub.s32 1, %v223
  %v225 = vrot.slane %v216, %v224
  %228 = vmatprep.subr.mxu0 %v215
  %229 = vmatpush1.msra.mxu0 %v214
  %230 = vmatprep.subr.mxu0 %v213
  %231 = vmatpush1.msra.mxu0 %v212
  %232 = vmatprep.subr.mxu0 %v211
  %233 = vmatpush1.msra.mxu0 %v210
  %234 = vmatprep.subr.mxu0 %v209
  %235 = vmatpush1.msra.mxu0 %v208
  %236 = vmatprep.subr.mxu0 %v207
  %237 = vmatpush1.msra.mxu0 %v206
  %238 = vmatprep.subr.mxu0 %v205
  %239 = vmatpush1.msra.mxu0 %v204
  %240 = vmatprep.subr.mxu0 %v203
  %241 = vmatpush1.msra.mxu0 %v202
  %242 = vmatprep.subr.mxu0 %v201
  %243 = vmatpush1.msra.mxu0 %v200
  %244 = vmatprep.subr.mxu0 %v199
  %245 = vmatpush1.msra.mxu0 %v198
  %246 = vmatprep.subr.mxu0 %v197
  %247 = vmatpush1.msra.mxu0 %v196
  %248 = vmatprep.subr.mxu0 %v195
  %249 = vmatpush1.msra.mxu0 %v194
  %250 = vmatprep.subr.mxu0 %v193
  %251 = vmatpush1.msra.mxu0 %v192
  %252 = vmatprep.subr.mxu0 %v191
  %253 = vmatpush1.msra.mxu0 %v190
  %254 = vmatprep.subr.mxu0 %v189
  %255 = vmatpush1.msra.mxu0 %v188
  %256 = vmatprep.subr.mxu0 %v187
  %257 = vmatpush1.msra.mxu0 %v186
  %258 = vmatprep.subr.mxu0 %v185
  %259 = vmatpush1.msra.mxu0 %v184
  %260 = vmatprep.subr.mxu0 0.0
  %261 = vmatpush2.msra.mxu0 0.0
  %262 = vmatprep.subr.mxu0 0.0
  %263 = vmatpush2.msra.mxu0 0.0
  %264 = vmatprep.subr.mxu0 0.0
  %265 = vmatpush2.msra.mxu0 0.0
  %266 = vmatprep.subr.mxu0 0.0
  %267 = vmatpush2.msra.mxu0 0.0
  %268 = vmatprep.subr.mxu0 0.0
  %269 = vmatpush2.msra.mxu0 0.0
  %270 = vmatprep.subr.mxu0 0.0
  %271 = vmatpush2.msra.mxu0 0.0
  %272 = vmatprep.subr.mxu0 0.0
  %273 = vmatpush2.msra.mxu0 0.0
  %274 = vmatprep.subr.mxu0 0.0
  %275 = vmatpush2.msra.mxu0 0.0
  %276 = vmatprep.subr.mxu0 0.0
  %277 = vmatpush2.msra.mxu0 0.0
  %278 = vmatprep.subr.mxu0 0.0
  %279 = vmatpush2.msra.mxu0 0.0
  %280 = vmatprep.subr.mxu0 0.0
  %281 = vmatpush2.msra.mxu0 0.0
  %282 = vmatprep.subr.mxu0 0.0
  %283 = vmatpush2.msra.mxu0 0.0
  %284 = vmatprep.subr.mxu0 0.0
  %285 = vmatpush2.msra.mxu0 0.0
  %286 = vmatprep.subr.mxu0 0.0
  %287 = vmatpush2.msra.mxu0 0.0
  %288 = vmatprep.subr.mxu0 0.0
  %289 = vmatpush2.msra.mxu0 0.0
  %290 = vmatprep.subr.mxu0 0.0
  %291 = vmatpush2.msra.mxu0 0.0
  %292 = vmatprep.mubr.f32.mxu0 0.0
  %293 = vmatmul.mubr.f32.gmra.mxu0 %v183
  %v294 = vpop.f32.mrf.mxu0
  %v295 = vadd.f32 %v221, %v294
  %v296 = vpop.f32.mrf.mxu0
  %v297 = vadd.f32 %v225, %v296
  %298 = vdwg.mxu0
  %v299 = vmax.f32 %v295, 0.0
  %v300 = vmax.f32 %v297, 0.0
  %v301 = vld [vmem:[%s4] sm:$0xff]
  %v302 = vld [vmem:[%s4 + $0x8] sm:$0xff]
  %v303 = vld [vmem:[%s4 + $0x10] sm:$0xff]
  %v304 = vld [vmem:[%s4 + $0x18] sm:$0xff]
  %v305 = vld [vmem:[%s4 + $0x20] sm:$0xff]
  %v306 = vld [vmem:[%s4 + $0x28] sm:$0xff]
  %v307 = vld [vmem:[%s4 + $0x30] sm:$0xff]
  %v308 = vld [vmem:[%s4 + $0x38] sm:$0xff]
  %v309 = vld [vmem:[%s4 + $0x40] sm:$0xff]
  %v310 = vld [vmem:[%s4 + $0x48] sm:$0xff]
  %v311 = vld [vmem:[%s4 + $0x50] sm:$0xff]
  %v312 = vld [vmem:[%s4 + $0x58] sm:$0xff]
  %v313 = vld [vmem:[%s4 + $0x60] sm:$0xff]
  %v314 = vld [vmem:[%s4 + $0x68] sm:$0xff]
  %v315 = vld [vmem:[%s4 + $0x70] sm:$0xff]
  %v316 = vld [vmem:[%s4 + $0x78] sm:$0xff]
  %v317 = vld [vmem:[%s4 + $0x80] sm:$0xff]
  %v318 = vld [vmem:[%s4 + $0x88] sm:$0xff]
  %v319 = vld [vmem:[%s4 + $0x90] sm:$0xff]
  %v320 = vld [vmem:[%s4 + $0x98] sm:$0xff]
  %v321 = vld [vmem:[%s4 + $0xa0] sm:$0xff]
  %v322 = vld [vmem:[%s4 + $0xa8] sm:$0xff]
  %v323 = vld [vmem:[%s4 + $0xb0] sm:$0xff]
  %v324 = vld [vmem:[%s4 + $0xb8] sm:$0xff]
  %v325 = vld [vmem:[%s4 + $0xc0] sm:$0xff]
  %v326 = vld [vmem:[%s4 + $0xc8] sm:$0xff]
  %v327 = vld [vmem:[%s4 + $0xd0] sm:$0xff]
  %v328 = vld [vmem:[%s4 + $0xd8] sm:$0xff]
  %v329 = vld [vmem:[%s4 + $0xe0] sm:$0xff]
  %v330 = vld [vmem:[%s4 + $0xe8] sm:$0xff]
  %v331 = vld [vmem:[%s4 + $0xf0] sm:$0xff]
  %v332 = vld [vmem:[%s4 + $0xf8] sm:$0xff]
  %v333 = vld [vmem:[%s5] sm:$0x1]
  %v335 = vlaneseq
  %v336 = vshrl.u32 %v335, 7
  %v337 = vsub.s32 0, %v336
  %v338 = vrot.slane %v333, %v337
  %340 = vmatprep.subr.mxu0 0.0
  %341 = vmatpush1.msra.mxu0 %v316
  %342 = vmatprep.subr.mxu0 0.0
  %343 = vmatpush1.msra.mxu0 %v315
  %344 = vmatprep.subr.mxu0 0.0
  %345 = vmatpush1.msra.mxu0 %v314
  %346 = vmatprep.subr.mxu0 0.0
  %347 = vmatpush1.msra.mxu0 %v313
  %348 = vmatprep.subr.mxu0 0.0
  %349 = vmatpush1.msra.mxu0 %v312
  %350 = vmatprep.subr.mxu0 0.0
  %351 = vmatpush1.msra.mxu0 %v311
  %352 = vmatprep.subr.mxu0 0.0
  %353 = vmatpush1.msra.mxu0 %v310
  %354 = vmatprep.subr.mxu0 0.0
  %355 = vmatpush1.msra.mxu0 %v309
  %356 = vmatprep.subr.mxu0 0.0
  %357 = vmatpush1.msra.mxu0 %v308
  %358 = vmatprep.subr.mxu0 0.0
  %359 = vmatpush1.msra.mxu0 %v307
  %360 = vmatprep.subr.mxu0 0.0
  %361 = vmatpush1.msra.mxu0 %v306
  %362 = vmatprep.subr.mxu0 0.0
  %363 = vmatpush1.msra.mxu0 %v305
  %364 = vmatprep.subr.mxu0 0.0
  %365 = vmatpush1.msra.mxu0 %v304
  %366 = vmatprep.subr.mxu0 0.0
  %367 = vmatpush1.msra.mxu0 %v303
  %368 = vmatprep.subr.mxu0 0.0
  %369 = vmatpush1.msra.mxu0 %v302
  %370 = vmatprep.subr.mxu0 0.0
  %371 = vmatpush1.msra.mxu0 %v301
  %372 = vmatprep.subr.mxu0 0.0
  %373 = vmatpush2.msra.mxu0 %v332
  %374 = vmatprep.subr.mxu0 0.0
  %375 = vmatpush2.msra.mxu0 %v331
  %376 = vmatprep.subr.mxu0 0.0
  %377 = vmatpush2.msra.mxu0 %v330
  %378 = vmatprep.subr.mxu0 0.0
  %379 = vmatpush2.msra.mxu0 %v329
  %380 = vmatprep.subr.mxu0 0.0
  %381 = vmatpush2.msra.mxu0 %v328
  %382 = vmatprep.subr.mxu0 0.0
  %383 = vmatpush2.msra.mxu0 %v327
  %384 = vmatprep.subr.mxu0 0.0
  %385 = vmatpush2.msra.mxu0 %v326
  %386 = vmatprep.subr.mxu0 0.0
  %387 = vmatpush2.msra.mxu0 %v325
  %388 = vmatprep.subr.mxu0 0.0
  %389 = vmatpush2.msra.mxu0 %v324
  %390 = vmatprep.subr.mxu0 0.0
  %391 = vmatpush2.msra.mxu0 %v323
  %392 = vmatprep.subr.mxu0 0.0
  %393 = vmatpush2.msra.mxu0 %v322
  %394 = vmatprep.subr.mxu0 0.0
  %395 = vmatpush2.msra.mxu0 %v321
  %396 = vmatprep.subr.mxu0 0.0
  %397 = vmatpush2.msra.mxu0 %v320
  %398 = vmatprep.subr.mxu0 0.0
  %399 = vmatpush2.msra.mxu0 %v319
  %400 = vmatprep.subr.mxu0 0.0
  %401 = vmatpush2.msra.mxu0 %v318
  %402 = vmatprep.subr.mxu0 0.0
  %403 = vmatpush2.msra.mxu0 %v317
  %404 = vmatprep.mubr.f32.mxu0 %v300
  %405 = vmatmul.mubr.f32.gmra.mxu0 %v299
  %v406 = vpop.f32.mrf.mxu0
  %v407 = vadd.f32 %v338, %v406
  %v408 = vpop.f32.mrf.mxu0
  %409 = vdwg.mxu0
  %v410 = vadd.f32 %v407, %v23
  %411 = vst [vmem:[%s6] sm:$0xff] %v410
  // Predicated region
  $region26: #{mlp_forward.1} parent=0 // pred_check
    _
  $region27: #{mlp_forward.1} parent=0 // pred_check_branch
    %413 = sbr.rel (0) target = $region29
  $region28: #{mlp_forward.1} parent=0 // pred_region
    _
  $region29: #{mlp_forward.1} parent=0 // pred_fallthru
    _
  // Predicated region
  $region30: #{mlp_forward.1} parent=0 // pred_check
    _
  $region31: #{mlp_forward.1} parent=0 // pred_check_branch
    %415 = sbr.rel (0) target = $region33
  $region32: #{mlp_forward.1} parent=0 // pred_region
    _
  $region33: #{mlp_forward.1} parent=0 // pred_fallthru
    _

</llo_original>
